<compile_context>
chip_gen: v6e
topology: v6e:2x2x1
jax: 0.10.0
libtpu: 0.0.40
codegen_flags: <defaults>
</compile_context>

<pallas_src>
import functools

import jax
import jax.numpy as jnp
from jax.experimental import pallas as pl
from jax.experimental.pallas import tpu as pltpu


_STEP_VMEM_BUDGET = 28 * 1024 * 1024  # target per-grid-step VMEM footprint


def _round_up(x, m):
    return (x + m - 1) // m * m


def _cdiv(x, m):
    return (x + m - 1) // m


def _sublane_multiple(dtype):
    itemsize = jnp.dtype(dtype).itemsize
    if itemsize >= 4:
        return 8
    if itemsize == 2:
        return 16
    return 32


def _soft_dice_kernel(logits_ref, targets_ref, dice_ref, inter_ref, union_ref,
                      *, smooth, hw, tc, needs_mask):
    k = pl.program_id(1)

    @pl.when(k == 0)
    def _():
        inter_ref[...] = jnp.zeros_like(inter_ref)
        union_ref[...] = jnp.zeros_like(union_ref)

    x = logits_ref[...].astype(jnp.float32)
    t = targets_ref[...].astype(jnp.float32)
    # Single-transcendental sigmoid (one EUP tanh; avoids exp + exact divide).
    prob = 0.5 * (jnp.tanh(0.5 * x) + 1.0)

    if needs_mask:
        # Last spatial chunk extends past hw: zero the out-of-range lanes so
        # they contribute nothing to intersection / union.
        col = k * tc + jax.lax.broadcasted_iota(jnp.int32, x.shape, 1)
        valid = col < hw
        prob = jnp.where(valid, prob, 0.0)
        t = jnp.where(valid, t, 0.0)

    inter_ref[...] += jnp.sum(prob * t, axis=-1, keepdims=True)
    # Single fused reduction instead of sum(prob) + sum(tgt).
    union_ref[...] += jnp.sum(prob + t, axis=-1, keepdims=True)

    @pl.when(k == pl.num_programs(1) - 1)
    def _():
        # Per-row divide is O(N*C) total -> exact divide, keeps full accuracy.
        dice_ref[...] = (2.0 * inter_ref[...] + smooth) / (union_ref[...] + smooth)


def soft_dice_loss(logits, targets, smooth=1e-6):
    """Pallas TPU implementation of SoftDiceLoss.forward (NCHW inputs)."""
    assert logits.shape == targets.shape
    N, C, H, W = logits.shape
    nc = N * C
    hw = H * W

    # Row-major collapse: no data movement, no padding copies.
    logits_f = logits.reshape(nc, hw)
    targets_f = targets.reshape(nc, hw)
    if logits_f.dtype not in (jnp.float32, jnp.bfloat16, jnp.float16):
        logits_f = logits_f.astype(jnp.float32)
    if targets_f.dtype not in (jnp.float32, jnp.bfloat16, jnp.float16):
        targets_f = targets_f.astype(logits_f.dtype)

    sublane = max(_sublane_multiple(logits_f.dtype),
                  _sublane_multiple(targets_f.dtype))

    # Per-element VMEM cost for one grid step: two double-buffered input tiles
    # plus ~5 full-tile f32 intermediates (prob, cast target, prob*t, prob+t,
    # slack for Mosaic temporaries).
    bytes_per_elem = (2 * (jnp.dtype(logits_f.dtype).itemsize
                           + jnp.dtype(targets_f.dtype).itemsize)
                      + 5 * 4)
    budget_elems = _STEP_VMEM_BUDGET // bytes_per_elem

    hw_lanes = _round_up(hw, 128)
    if sublane * hw_lanes <= budget_elems:
        # Whole spatial plane per step; the last block dim equals the full
        # array dim, so it is exempt from the 128-divisibility rule.
        tc, tc_lanes = hw, hw_lanes
    else:
        # Large planes: split the spatial axis into 128-aligned chunks and
        # accumulate partial intersection/union across the "arbitrary" axis.
        tc = max(128, (budget_elems // sublane) // 128 * 128)
        tc_lanes = tc

    tm_budget = max(sublane, (budget_elems // tc_lanes) // sublane * sublane)
    if nc < 2 * sublane:
        # Too few planes for two aligned row blocks: use the full row dim
        # (exempt from the 8/16-sublane divisibility rule).
        tm = nc if tm_budget >= nc else sublane
    else:
        # Multiple-of-sublane tile, never larger than nc, and small enough to
        # give >= 2 row steps so "parallel" can shard across v7x's two cores.
        tm = min(tm_budget, (nc // sublane) * sublane,
                 _round_up(_cdiv(nc, 2), sublane))

    grid_rows = _cdiv(nc, tm)
    grid_cols = _cdiv(hw, tc)
    needs_mask = (hw % tc) != 0

    # Scoped-VMEM request derived from the actual footprint + headroom; stays
    # well under v7x's 64 MiB physical VMEM.
    step_bytes = _round_up(tm, sublane) * tc_lanes * bytes_per_elem
    vmem_limit = int(min(48 * 1024 * 1024,
                         max(16 * 1024 * 1024, step_bytes + (4 << 20))))

    kernel = functools.partial(_soft_dice_kernel, smooth=float(smooth),
                               hw=hw, tc=tc, needs_mask=needs_mask)

    dice = pl.pallas_call(
        kernel,
        out_shape=jax.ShapeDtypeStruct((nc, 1), jnp.float32),
        grid_spec=pltpu.PrefetchScalarGridSpec(
            num_scalar_prefetch=0,
            grid=(grid_rows, grid_cols),
            in_specs=[
                pl.BlockSpec((tm, tc), lambda i, k: (i, k)),
                pl.BlockSpec((tm, tc), lambda i, k: (i, k)),
            ],
            out_specs=pl.BlockSpec((tm, 1), lambda i, k: (i, 0)),
            scratch_shapes=[
                pltpu.VMEM((tm, 1), jnp.float32),   # intersection accumulator
                pltpu.VMEM((tm, 1), jnp.float32),   # union accumulator
            ],
        ),
        compiler_params=pltpu.CompilerParams(
            dimension_semantics=("parallel", "arbitrary"),
            vmem_limit_bytes=vmem_limit,
        ),
    )(logits_f, targets_f)

    # Final scalar reduction over N*C dice scores is negligible; do it in JAX.
    return 1.0 - jnp.mean(dice[:, 0])


def soft_dice_loss_ref(logits, targets, smooth=1e-6):
    prob = jax.nn.sigmoid(logits)
    intersection = jnp.sum(prob * targets, axis=(2, 3))
    union = jnp.sum(prob, axis=(2, 3)) + jnp.sum(targets, axis=(2, 3))
    dice = (2.0 * intersection + smooth) / (union + smooth)
    return 1.0 - jnp.mean(dice)


if __name__ == "__main__":
    key = jax.random.PRNGKey(0)
    k1, k2, k3, k4 = jax.random.split(key, 4)

    # Shapes implied by the module (NCHW segmentation logits / binary masks).
    N, C, H, W = 2, 4, 16, 16
    logits = jax.random.normal(k1, (N, C, H, W), dtype=jnp.float32)
    targets = (jax.random.uniform(k2, (N, C, H, W)) > 0.5).astype(jnp.float32)

    loss = soft_dice_loss(logits, targets)
    jax.block_until_ready(loss)
    ref = soft_dice_loss_ref(logits, targets)
    assert jnp.allclose(loss, ref, atol=1e-5, rtol=1e-4), (loss, ref)

    # Second small check: >= 2 row blocks (exercises the "parallel" row axis
    # and per-block accumulator reset) and a spatial size not a multiple of 128.
    N2, C2, H2, W2 = 4, 8, 10, 12
    logits2 = jax.random.normal(k3, (N2, C2, H2, W2), dtype=jnp.float32)
    targets2 = (jax.random.uniform(k4, (N2, C2, H2, W2)) > 0.5).astype(jnp.float32)
    loss2 = soft_dice_loss(logits2, targets2)
    jax.block_until_ready(loss2)
    ref2 = soft_dice_loss_ref(logits2, targets2)
    assert jnp.allclose(loss2, ref2, atol=1e-5, rtol=1e-4), (loss2, ref2)

    print("KERNEL_OK")
</pallas_src>

<mosaic_0001>
module attributes {stable_mosaic.version = 11 : i64} {
  func.func @_soft_dice_kernel(%arg0: i32, %arg1: i32, %arg2: memref<8x256xf32, #tpu.memory_space<vmem>>, %arg3: memref<8x256xf32, #tpu.memory_space<vmem>>, %arg4: memref<8x1xf32, #tpu.memory_space<vmem>>, %arg5: memref<8x1xf32, #tpu.memory_space<vmem>>, %arg6: memref<8x1xf32, #tpu.memory_space<vmem>>) attributes {dimension_semantics = [#tpu.dimension_semantics<parallel>, #tpu.dimension_semantics<arbitrary>], iteration_bounds = array<i64: 1, 1>, scalar_prefetch = 0 : i64, scratch_operands = 2 : i64, tpu.core_type = #tpu.core_type<tc>, window_params = [{transform_indices = @transform_0, window_bounds = array<i64: 8, 256>}, {transform_indices = @transform_1, window_bounds = array<i64: 8, 256>}, {transform_indices = @transform_2, window_bounds = array<i64: 8, 1>}]} {
    %c0_i32 = arith.constant 0 : i32
    %0 = arith.cmpi eq, %arg1, %c0_i32 : i32
    %1 = arith.extui %0 : i1 to i32
    %c0_i32_0 = arith.constant 0 : i32
    %2 = arith.cmpi ne, %1, %c0_i32_0 : i32
    scf.if %2 {
      %cst_18 = arith.constant 0.000000e+00 : f32
      %27 = vector.broadcast %cst_18 : f32 to vector<8x1xf32>
      %c0_19 = arith.constant 0 : index
      %c0_20 = arith.constant 0 : index
      %28 = vector.load %arg5[%c0_19, %c0_20] : memref<8x1xf32, #tpu.memory_space<vmem>>, vector<8x1xf32>
      tpu.vector_store %arg5[%c0_19, %c0_20], %27 {strides = array<i32>} : memref<8x1xf32, #tpu.memory_space<vmem>>, vector<8x1xf32>,
      %cst_21 = arith.constant 0.000000e+00 : f32
      %29 = vector.broadcast %cst_21 : f32 to vector<8x1xf32>
      %c0_22 = arith.constant 0 : index
      %c0_23 = arith.constant 0 : index
      %30 = vector.load %arg6[%c0_22, %c0_23] : memref<8x1xf32, #tpu.memory_space<vmem>>, vector<8x1xf32>
      tpu.vector_store %arg6[%c0_22, %c0_23], %29 {strides = array<i32>} : memref<8x1xf32, #tpu.memory_space<vmem>>, vector<8x1xf32>,
    } else {
    }
    %c0 = arith.constant 0 : index
    %c0_1 = arith.constant 0 : index
    %3 = vector.load %arg2[%c0, %c0_1] : memref<8x256xf32, #tpu.memory_space<vmem>>, vector<8x256xf32>
    %c0_2 = arith.constant 0 : index
    %c0_3 = arith.constant 0 : index
    %4 = vector.load %arg3[%c0_2, %c0_3] : memref<8x256xf32, #tpu.memory_space<vmem>>, vector<8x256xf32>
    %cst = arith.constant 5.000000e-01 : f32
    %5 = vector.broadcast %cst : f32 to vector<8x256xf32>
    %6 = arith.mulf %5, %3 : vector<8x256xf32>
    %7 = math.tanh %6 : vector<8x256xf32>
    %cst_4 = arith.constant 1.000000e+00 : f32
    %8 = vector.broadcast %cst_4 : f32 to vector<8x256xf32>
    %9 = arith.addf %7, %8 : vector<8x256xf32>
    %cst_5 = arith.constant 5.000000e-01 : f32
    %10 = vector.broadcast %cst_5 : f32 to vector<8x256xf32>
    %11 = arith.mulf %10, %9 : vector<8x256xf32>
    %c0_6 = arith.constant 0 : index
    %c0_7 = arith.constant 0 : index
    %12 = vector.load %arg5[%c0_6, %c0_7] : memref<8x1xf32, #tpu.memory_space<vmem>>, vector<8x1xf32>
    %13 = arith.mulf %11, %4 : vector<8x256xf32>
    %cst_8 = arith.constant dense<0.000000e+00> : vector<8xf32>
    %14 = vector.multi_reduction <add>, %13, %cst_8 [1] : vector<8x256xf32> to vector<8xf32>
    %15 = vector.shape_cast %14 : vector<8xf32> to vector<8x1xf32>
    %16 = arith.addf %12, %15 : vector<8x1xf32>
    %c0_9 = arith.constant 0 : index
    %c0_10 = arith.constant 0 : index
    %17 = vector.load %arg5[%c0_9, %c0_10] : memref<8x1xf32, #tpu.memory_space<vmem>>, vector<8x1xf32>
    tpu.vector_store %arg5[%c0_9, %c0_10], %16 {strides = array<i32>} : memref<8x1xf32, #tpu.memory_space<vmem>>, vector<8x1xf32>,
    %c0_11 = arith.constant 0 : index
    %c0_12 = arith.constant 0 : index
    %18 = vector.load %arg6[%c0_11, %c0_12] : memref<8x1xf32, #tpu.memory_space<vmem>>, vector<8x1xf32>
    %19 = arith.addf %11, %4 : vector<8x256xf32>
    %cst_13 = arith.constant dense<0.000000e+00> : vector<8xf32>
    %20 = vector.multi_reduction <add>, %19, %cst_13 [1] : vector<8x256xf32> to vector<8xf32>
    %21 = vector.shape_cast %20 : vector<8xf32> to vector<8x1xf32>
    %22 = arith.addf %18, %21 : vector<8x1xf32>
    %c0_14 = arith.constant 0 : index
    %c0_15 = arith.constant 0 : index
    %23 = vector.load %arg6[%c0_14, %c0_15] : memref<8x1xf32, #tpu.memory_space<vmem>>, vector<8x1xf32>
    tpu.vector_store %arg6[%c0_14, %c0_15], %22 {strides = array<i32>} : memref<8x1xf32, #tpu.memory_space<vmem>>, vector<8x1xf32>,
    %c0_i32_16 = arith.constant 0 : i32
    %24 = arith.cmpi eq, %arg1, %c0_i32_16 : i32
    %25 = arith.extui %24 : i1 to i32
    %c0_i32_17 = arith.constant 0 : i32
    %26 = arith.cmpi ne, %25, %c0_i32_17 : i32
    scf.if %26 {
      %c0_18 = arith.constant 0 : index
      %c0_19 = arith.constant 0 : index
      %27 = vector.load %arg5[%c0_18, %c0_19] : memref<8x1xf32, #tpu.memory_space<vmem>>, vector<8x1xf32>
      %cst_20 = arith.constant 2.000000e+00 : f32
      %28 = vector.broadcast %cst_20 : f32 to vector<8x1xf32>
      %29 = arith.mulf %28, %27 : vector<8x1xf32>
      %cst_21 = arith.constant 9.99999997E-7 : f32
      %30 = vector.broadcast %cst_21 : f32 to vector<8x1xf32>
      %31 = arith.addf %29, %30 : vector<8x1xf32>
      %c0_22 = arith.constant 0 : index
      %c0_23 = arith.constant 0 : index
      %32 = vector.load %arg6[%c0_22, %c0_23] : memref<8x1xf32, #tpu.memory_space<vmem>>, vector<8x1xf32>
      %cst_24 = arith.constant 9.99999997E-7 : f32
      %33 = vector.broadcast %cst_24 : f32 to vector<8x1xf32>
      %34 = arith.addf %32, %33 : vector<8x1xf32>
      %35 = arith.divf %31, %34 : vector<8x1xf32>
      %c0_25 = arith.constant 0 : index
      %c0_26 = arith.constant 0 : index
      %36 = vector.load %arg4[%c0_25, %c0_26] : memref<8x1xf32, #tpu.memory_space<vmem>>, vector<8x1xf32>
      tpu.vector_store %arg4[%c0_25, %c0_26], %35 {strides = array<i32>} : memref<8x1xf32, #tpu.memory_space<vmem>>, vector<8x1xf32>,
    } else {
    }
    return
  }
  func.func @transform_0(%arg0: i32, %arg1: i32) -> (i32, i32) {
    %c0_i32 = arith.constant 0 : i32
    return %arg0, %arg1 : i32, i32
  }
  func.func @transform_1(%arg0: i32, %arg1: i32) -> (i32, i32) {
    %c0_i32 = arith.constant 0 : i32
    return %arg0, %arg1 : i32, i32
  }
  func.func @transform_2(%arg0: i32, %arg1: i32) -> (i32, i32) {
    %c0_i32 = arith.constant 0 : i32
    %c0_i32_0 = arith.constant 0 : i32
    return %arg0, %c0_i32 : i32, i32
  }
}

</mosaic_0001>

<llo_original>
// kernel: tpu_custom_call.1
$region0: #{tpu_custom_call.1}
  #allocation0 [shape = 'u32[]', space=smem, size = 0x4, offset = 0x4, fixed_abs, tag = 'smem constant byte address 0x4 - core index']
  #allocation1 [shape = 'u32[144,128]{1,0:T(1,128)}', space=vmem, size = 0x12000, scoped, tag = 'internal scratch']
  #allocation2 [shape = 'f32[8,1]{1,0:T(8,128)}', space=vmem, size = 0x1000, scoped, tag = 'scratch operand']
  #allocation3 [shape = 'f32[8,1]{1,0:T(8,128)}', space=vmem, size = 0x1000, scoped, tag = 'scratch operand']
  %s0 = inlined_call_operand.hbm [shape: f32[8,256], index: 0, kind: input, shape index: {}]
  %s1 = inlined_call_operand.hbm [shape: f32[8,256], index: 1, kind: input, shape index: {}]
  %s2 = inlined_call_operand.vmem [shape: f32[8,1], index: 2, kind: output, shape index: {}]
  %s3 = sld [smem:[#allocation0]]
  $region34: #{tpu_custom_call.1} parent=0
    _
  %s5 = ssub.s32 1, %s3
  %s6 = scalar_select 0, %s5, %s3
  $region1: #{tpu_custom_call.1} parent=0
    #allocation4 [shape = 'u8[8192]{0}', space=vmem, size = 0x2000, scoped, tag = 'input window, operand 0, single buffered']
    #allocation5 [shape = 's32[1]{0}', space=sflag, size = 0x4, scoped, tag = 'scoped memory for tpu_custom_call.1']
    #allocation6 [shape = 'u8[8192]{0}', space=vmem, size = 0x2000, scoped, tag = 'input window, operand 1, single buffered']
    #allocation7 [shape = 's32[1]{0}', space=sflag, size = 0x4, scoped, tag = 'scoped memory for tpu_custom_call.1']
    %7 = vsyncpa [#allocation5], 0
    %8 = vsyncpa [#allocation7], 0
    // Predicated region
    $region2: #{tpu_custom_call.1} parent=1 // pred_check
      _
    $region3: #{tpu_custom_call.1} parent=1 // pred_check_branch
      %10 = sbr.rel (0) target = $region5
    $region4: #{tpu_custom_call.1} parent=1 // pred_region
      %s12 = ssub.s32 256, 256
      %13 = vsyncadd [#allocation5], %s12
      %s15 = sshll.u32 [#allocation4], 4
      %s16 = int_to_ptr.vmem [resolvable:$true] %s15
      %18 = dma.hbm_to_vmem [thread:$0]  %s0, 256, %s16, [#allocation5]
    $region5: #{tpu_custom_call.1} parent=1 // pred_fallthru
      _
    // Predicated region
    $region6: #{tpu_custom_call.1} parent=1 // pred_check
      _
    $region7: #{tpu_custom_call.1} parent=1 // pred_check_branch
      %20 = sbr.rel (0) target = $region9
    $region8: #{tpu_custom_call.1} parent=1 // pred_region
      %s22 = ssub.s32 256, 256
      %23 = vsyncadd [#allocation7], %s22
      %s25 = sshll.u32 [#allocation6], 4
      %s26 = int_to_ptr.vmem [resolvable:$true] %s25
      %28 = dma.hbm_to_vmem [thread:$0]  %s1, 256, %s26, [#allocation7]
    $region9: #{tpu_custom_call.1} parent=1 // pred_fallthru
      _
    // Predicated region
    $region10: #{tpu_custom_call.1} parent=1 // pred_check
      _
    $region11: #{tpu_custom_call.1} parent=1 // pred_check_branch
      %30 = sbr.rel (0) target = $region13
    $region12: #{tpu_custom_call.1} parent=1 // pred_region
      %31 = dma.done [#allocation5], 256
    $region13: #{tpu_custom_call.1} parent=1 // pred_fallthru
      _
    // Predicated region
    $region14: #{tpu_custom_call.1} parent=1 // pred_check
      _
    $region15: #{tpu_custom_call.1} parent=1 // pred_check_branch
      %33 = sbr.rel (0) target = $region17
    $region16: #{tpu_custom_call.1} parent=1 // pred_region
      %34 = dma.done [#allocation7], 256
    $region17: #{tpu_custom_call.1} parent=1 // pred_fallthru
      _
    %p35 = scmp.eq.s32.totalorder 0, 0
    // Predicated region
    $region18: #{tpu_custom_call.1} parent=1 // pred_check
      %p36 = pneg %p35
    $region19: #{tpu_custom_call.1} parent=1 // pred_check_branch
      %38 = sbr.rel (%p36) target = $region21
    $region20: #{tpu_custom_call.1} parent=1 // pred_region
      %vm39 = vcmask 7168
      %40 = vst.msk [vmem:[#allocation2] sm:$0xff] %vm39, 0.0
      %41 = vst.msk [vmem:[#allocation3] sm:$0xff] %vm39, 0.0
    $region21: #{tpu_custom_call.1} parent=1 // pred_fallthru
      _
    %v42 = vld [vmem:[#allocation4] sm:$0xff]
    %v43 = vld [vmem:[#allocation4 + $0x8] sm:$0xff]
    %v44 = vld [vmem:[#allocation6] sm:$0xff]
    %v45 = vld [vmem:[#allocation6 + $0x8] sm:$0xff]
    %v46 = vmul.f32 %v42, 0.5
    %v47 = vmul.f32 %v43, 0.5
    %v48 = vtanh.pop %v46
    %v49 = vtanh.pop %v47
    %v50 = vadd.f32 %v48, 1.0
    %v51 = vadd.f32 %v49, 1.0
    %v52 = vmul.f32 %v50, 0.5
    %v53 = vmul.f32 %v51, 0.5
    %v54 = vld [vmem:[#allocation2] sm:$0xff]
    %v55 = vmul.f32 %v52, %v44
    %v56 = vmul.f32 %v53, %v45
    %v57 = vadd.f32 %v55, %v56
    %58 = vadd.xlane.f32.xlu0 %v57
    %v59 = vpop.xlane.xlu0 %58
    %v60 = vadd.f32 %v54, %v59
    %vm61 = vcmask 7168
    %62 = vst.msk [vmem:[#allocation2] sm:$0xff] %vm61, %v60
    %v63 = vld [vmem:[#allocation3] sm:$0xff]
    %v64 = vadd.f32 %v52, %v44
    %v65 = vadd.f32 %v53, %v45
    %v66 = vadd.f32 %v64, %v65
    %67 = vadd.xlane.f32.xlu0 %v66
    %v68 = vpop.xlane.xlu0 %67
    %v69 = vadd.f32 %v63, %v68
    %70 = vst.msk [vmem:[#allocation3] sm:$0xff] %vm61, %v69
    // Predicated region
    $region22: #{tpu_custom_call.1} parent=1 // pred_check
      %p71 = pneg %p35
    $region23: #{tpu_custom_call.1} parent=1 // pred_check_branch
      %73 = sbr.rel (%p71) target = $region25
    $region24: #{tpu_custom_call.1} parent=1 // pred_region
      %v74 = vld [vmem:[#allocation2] sm:$0xff]
      %v75 = vmul.f32 %v74, 2.0
      %v76 = vadd.f32 %v75, 1e-06
      %v77 = vld [vmem:[#allocation3] sm:$0xff]
      %v78 = vadd.f32 %v77, 1e-06
      %v79 = vrcp.pop %v78
      %v80 = vmul.f32 %v76, %v79
      %81 = vst.msk [vmem:[%s2] sm:$0xff] %vm61, %v80
    $region25: #{tpu_custom_call.1} parent=1 // pred_fallthru
      _
    // Predicated region
    $region26: #{tpu_custom_call.1} parent=1 // pred_check
      _
    $region27: #{tpu_custom_call.1} parent=1 // pred_check_branch
      %83 = sbr.rel (0) target = $region29
    $region28: #{tpu_custom_call.1} parent=1 // pred_region
      _
    $region29: #{tpu_custom_call.1} parent=1 // pred_fallthru
      _
    // Predicated region
    $region30: #{tpu_custom_call.1} parent=1 // pred_check
      _
    $region31: #{tpu_custom_call.1} parent=1 // pred_check_branch
      %85 = sbr.rel (0) target = $region33
    $region32: #{tpu_custom_call.1} parent=1 // pred_region
      _
    $region33: #{tpu_custom_call.1} parent=1 // pred_fallthru
      _
    %86 = vsyncpa [#allocation5], 1
    %87 = vsyncpa [#allocation7], 1

</llo_original>
